<compile_context>
chip_gen: v7x
topology: tpu7x:2x2x1
jax: 0.10.0
libtpu: 0.0.40
codegen_flags: <defaults>
</compile_context>

<pallas_src>
import math
from functools import partial

import jax
import jax.numpy as jnp
from jax.experimental import pallas as pl
from jax.experimental.pallas import tpu as pltpu

# Raised scoped-VMEM limit: fits every generation (v5e/v6e 128 MiB, v7x 64 MiB).
_VMEM_LIMIT = 48 * 1024 * 1024


def _round_up(n: int, m: int) -> int:
    return pl.cdiv(n, m) * m


def _pad_rows(x2d, m_pad):
    m = x2d.shape[0]
    if m == m_pad:
        return x2d
    return jnp.pad(x2d, ((0, m_pad - m), (0, 0)))


# -----------------------------------------------------------------------------
# LayerNormalization (faithful to the reference module's literal math)
# -----------------------------------------------------------------------------
def _layernorm_kernel(x_ref, alpha_ref, bias_ref, o_ref, *, eps, batch):
    x = x_ref[...].astype(jnp.float32)                      # (B, S, D)
    alpha = alpha_ref[0]
    bias = bias_ref[0]
    mean = jnp.mean(x, axis=-1, keepdims=True)              # per-token feature mean
    # std over dim 0 (batch), unbiased -- exactly what `x.std(dim=1-1)` does in torch.
    # (batch == 1 would divide by zero, matching torch's NaN behavior.)
    xs = [x[i] for i in range(batch)]                       # static unroll over batch
    mu0 = sum(xs) / batch                                   # (S, D)
    var0 = sum((xi - mu0) ** 2 for xi in xs) / (batch - 1)  # (S, D)
    std = jnp.sqrt(var0)
    o_ref[...] = (alpha * (x - mean) / (std + eps) + bias).astype(o_ref.dtype)


def layer_norm(x, ln):
    alpha = jnp.asarray(ln["alpha"], jnp.float32).reshape(1)
    bias = jnp.asarray(ln["bias"], jnp.float32).reshape(1)
    return pl.pallas_call(
        partial(_layernorm_kernel, eps=float(ln["eps"]), batch=x.shape[0]),
        out_shape=jax.ShapeDtypeStruct(x.shape, x.dtype),
        in_specs=[
            pl.BlockSpec(memory_space=pltpu.MemorySpace.VMEM),
            pl.BlockSpec(memory_space=pltpu.MemorySpace.SMEM),
            pl.BlockSpec(memory_space=pltpu.MemorySpace.SMEM),
        ],
        out_specs=pl.BlockSpec(memory_space=pltpu.MemorySpace.VMEM),
    )(x, alpha, bias)


# -----------------------------------------------------------------------------
# Linear projection: x @ W + b (+ residual), tiled over token rows
# -----------------------------------------------------------------------------
def _linear_kernel(x_ref, w_ref, b_ref, o_ref):
    acc = jnp.dot(x_ref[...], w_ref[...], preferred_element_type=jnp.float32)
    o_ref[...] = (acc + b_ref[...].astype(jnp.float32)).astype(o_ref.dtype)


def _linear_residual_kernel(x_ref, w_ref, b_ref, r_ref, o_ref):
    acc = jnp.dot(x_ref[...], w_ref[...], preferred_element_type=jnp.float32)
    acc = acc + b_ref[...].astype(jnp.float32) + r_ref[...].astype(jnp.float32)
    o_ref[...] = acc.astype(o_ref.dtype)


def linear(x2d, w, b, residual=None, *, tile_m=256):
    """(M, d_in) @ (d_in, d_out) + b [+ residual]; M padded to a multiple of tile_m."""
    m, d_in = x2d.shape
    d_out = w.shape[1]
    m_pad = _round_up(m, tile_m)
    grid_m = m_pad // tile_m
    x_p = _pad_rows(x2d, m_pad)
    b2 = b.reshape(1, d_out)

    args = [x_p, w, b2]
    in_specs = [
        pl.BlockSpec((tile_m, d_in), lambda i: (i, 0)),
        pl.BlockSpec((d_in, d_out), lambda i: (0, 0)),
        pl.BlockSpec((1, d_out), lambda i: (0, 0)),
    ]
    kernel = _linear_kernel
    if residual is not None:
        r_p = _pad_rows(residual, m_pad)
        args.append(r_p)
        in_specs.append(pl.BlockSpec((tile_m, d_out), lambda i: (i, 0)))
        kernel = _linear_residual_kernel

    itemsize = x2d.dtype.itemsize
    bytes_accessed = (x_p.size + w.size + b2.size + m_pad * d_out) * itemsize
    if residual is not None:
        bytes_accessed += m_pad * d_out * itemsize

    out = pl.pallas_call(
        kernel,
        out_shape=jax.ShapeDtypeStruct((m_pad, d_out), x2d.dtype),
        grid_spec=pltpu.PrefetchScalarGridSpec(
            num_scalar_prefetch=0,
            grid=(grid_m,),
            in_specs=in_specs,
            out_specs=pl.BlockSpec((tile_m, d_out), lambda i: (i, 0)),
        ),
        compiler_params=pltpu.CompilerParams(
            dimension_semantics=("parallel",),
            vmem_limit_bytes=_VMEM_LIMIT,
        ),
        cost_estimate=pl.CostEstimate(
            flops=2 * m_pad * d_in * d_out,
            transcendentals=0,
            bytes_accessed=bytes_accessed,
        ),
    )(*args)
    return out[:m]


# -----------------------------------------------------------------------------
# Scaled dot-product attention, one (batch, head) pair per grid step
# -----------------------------------------------------------------------------
def _attention_kernel(q_ref, k_ref, v_ref, m_ref, o_ref, *, scale):
    q = q_ref[...]                                           # (Sq, dk)
    k = k_ref[...]                                           # (Sk, dk)
    v = v_ref[...]                                           # (Sk, dk)
    s = jax.lax.dot_general(q, k, (((1,), (1,)), ((), ())),
                            preferred_element_type=jnp.float32) * scale
    s = jnp.where(m_ref[...] == 0, -1e9, s)                  # masked_fill(mask == 0, -1e9)
    s = s - jnp.max(s, axis=-1, keepdims=True)
    p = jnp.exp(s)
    p = p / jnp.sum(p, axis=-1, keepdims=True)
    # attention-weight dropout (eval mode) == identity
    # TODO(synk): training-mode dropout would use pltpu.prng_seed + prng_random_bits.
    o_ref[...] = jnp.dot(p.astype(v.dtype), v,
                         preferred_element_type=jnp.float32).astype(o_ref.dtype)


def scaled_dot_product_attention(q, k, v, mask):
    """q: (B, H, Sq, dk), k/v: (B, H, Sk, dk), mask: (B, H, Sq, Sk)."""
    b, h, sq, dk = q.shape
    sk = k.shape[2]
    scale = 1.0 / math.sqrt(dk)
    itemsize = q.dtype.itemsize
    return pl.pallas_call(
        partial(_attention_kernel, scale=scale),
        out_shape=jax.ShapeDtypeStruct((b, h, sq, dk), q.dtype),
        grid_spec=pltpu.PrefetchScalarGridSpec(
            num_scalar_prefetch=0,
            grid=(b, h),
            in_specs=[
                pl.BlockSpec((None, None, sq, dk), lambda i, j: (i, j, 0, 0)),
                pl.BlockSpec((None, None, sk, dk), lambda i, j: (i, j, 0, 0)),
                pl.BlockSpec((None, None, sk, dk), lambda i, j: (i, j, 0, 0)),
                pl.BlockSpec((None, None, sq, sk), lambda i, j: (i, j, 0, 0)),
            ],
            out_specs=pl.BlockSpec((None, None, sq, dk), lambda i, j: (i, j, 0, 0)),
        ),
        compiler_params=pltpu.CompilerParams(
            dimension_semantics=("parallel", "parallel"),
            vmem_limit_bytes=_VMEM_LIMIT,
        ),
        cost_estimate=pl.CostEstimate(
            flops=4 * b * h * sq * sk * dk,
            transcendentals=b * h * sq * sk,
            bytes_accessed=(2 * q.size + k.size + v.size + mask.size) * itemsize,
        ),
    )(q, k, v, mask)


def multi_head_attention(q_in, kv_in, mask, p, residual, *, tile_m=256):
    b, sq, d = q_in.shape
    skv = kv_in.shape[1]
    h = p["h"]
    dk = d // h
    q = linear(q_in.reshape(b * sq, d), p["wq"], p["bq"], tile_m=tile_m)
    k = linear(kv_in.reshape(b * skv, d), p["wk"], p["bk"], tile_m=tile_m)
    v = linear(kv_in.reshape(b * skv, d), p["wv"], p["bv"], tile_m=tile_m)
    q = q.reshape(b, sq, h, dk).transpose(0, 2, 1, 3)
    k = k.reshape(b, skv, h, dk).transpose(0, 2, 1, 3)
    v = v.reshape(b, skv, h, dk).transpose(0, 2, 1, 3)
    mask_b = jnp.broadcast_to(mask, (b, h, sq, skv)).astype(jnp.float32)
    ctx = scaled_dot_product_attention(q, k, v, mask_b)
    ctx = ctx.transpose(0, 2, 1, 3).reshape(b * sq, d)
    out = linear(ctx, p["wo"], p["bo"],
                 residual=residual.reshape(b * sq, d), tile_m=tile_m)
    return out.reshape(b, sq, d)


# -----------------------------------------------------------------------------
# FeedForwardBlock: Linear -> ReLU -> (dropout=identity) -> Linear, fused,
# d_ff streamed over an "arbitrary" grid axis into a f32 VMEM accumulator.
# -----------------------------------------------------------------------------
def _ffn_kernel(x_ref, w1_ref, b1_ref, w2_ref, b2_ref, r_ref, o_ref, acc_ref):
    j = pl.program_id(1)

    @pl.when(j == 0)
    def _init():
        acc_ref[...] = jnp.zeros_like(acc_ref)

    # Native-dtype operands into the MXU; f32 accumulation.
    h = jnp.dot(x_ref[...], w1_ref[...], preferred_element_type=jnp.float32)
    h = jnp.maximum(h + b1_ref[...].astype(jnp.float32), 0.0)   # bias + ReLU in f32
    # dropout (eval mode) == identity
    # TODO(synk): training-mode dropout would use pltpu.prng_seed + prng_random_bits.
    acc_ref[...] += jnp.dot(h.astype(w2_ref.dtype), w2_ref[...],
                            preferred_element_type=jnp.float32)

    @pl.when(j == pl.num_programs(1) - 1)
    def _finalize():
        o_ref[...] = (acc_ref[...]
                      + b2_ref[...].astype(jnp.float32)
                      + r_ref[...].astype(jnp.float32)).astype(o_ref.dtype)


def feed_forward(x2d, p, residual2d, *, tile_m=256, tile_f=512):
    m, d_model = x2d.shape
    d_ff = p["w1"].shape[1]

    m_pad = _round_up(m, tile_m)
    grid_m = m_pad // tile_m
    tile_f = min(tile_f, d_ff)
    f_pad = _round_up(d_ff, tile_f)
    grid_f = f_pad // tile_f

    x_p = _pad_rows(x2d, m_pad)
    r_p = _pad_rows(residual2d, m_pad)
    # Zero-padding d_ff is safe: relu(0 + 0) = 0 and the padded W2 rows are zero.
    w1_p = jnp.pad(p["w1"], ((0, 0), (0, f_pad - d_ff)))
    b1_p = jnp.pad(p["b1"].reshape(1, d_ff), ((0, 0), (0, f_pad - d_ff)))
    w2_p = jnp.pad(p["w2"], ((0, f_pad - d_ff), (0, 0)))
    b2_2 = p["b2"].reshape(1, d_model)

    itemsize = x2d.dtype.itemsize
    bytes_accessed = (x_p.size + w1_p.size + b1_p.size + w2_p.size + b2_2.size
                      + r_p.size + m_pad * d_model) * itemsize

    out = pl.pallas_call(
        _ffn_kernel,
        out_shape=jax.ShapeDtypeStruct((m_pad, d_model), x2d.dtype),
        grid_spec=pltpu.PrefetchScalarGridSpec(
            num_scalar_prefetch=0,
            grid=(grid_m, grid_f),                       # reduction (d_ff) axis last
            in_specs=[
                pl.BlockSpec((tile_m, d_model), lambda i, j: (i, 0)),
                pl.BlockSpec((d_model, tile_f), lambda i, j: (0, j)),
                pl.BlockSpec((1, tile_f), lambda i, j: (0, j)),
                pl.BlockSpec((tile_f, d_model), lambda i, j: (j, 0)),
                pl.BlockSpec((1, d_model), lambda i, j: (0, 0)),
                pl.BlockSpec((tile_m, d_model), lambda i, j: (i, 0)),
            ],
            out_specs=pl.BlockSpec((tile_m, d_model), lambda i, j: (i, 0)),
            scratch_shapes=[pltpu.VMEM((tile_m, d_model), jnp.float32)],
        ),
        compiler_params=pltpu.CompilerParams(
            dimension_semantics=("parallel", "arbitrary"),
            vmem_limit_bytes=_VMEM_LIMIT,
        ),
        cost_estimate=pl.CostEstimate(
            flops=4 * m_pad * d_model * f_pad,
            transcendentals=0,
            bytes_accessed=bytes_accessed,
        ),
    )(x_p, w1_p, b1_p, w2_p, b2_2, r_p)
    return out[:m]


# -----------------------------------------------------------------------------
# DecoderBlock forward
# -----------------------------------------------------------------------------
def decoder_block(x, encoder_output, src_mask, tgt_mask, params, *, tile_m=256, tile_f=512):
    b, s, d = x.shape
    # residual 0: x + SelfAttention(norm(x), norm(x), norm(x), tgt_mask)
    xn = layer_norm(x, params["ln"][0])
    x = multi_head_attention(xn, xn, tgt_mask, params["self_attn"],
                             residual=x, tile_m=tile_m)
    # residual 1: x + CrossAttention(norm(x), enc, enc, src_mask)
    xn = layer_norm(x, params["ln"][1])
    x = multi_head_attention(xn, encoder_output, src_mask, params["cross_attn"],
                             residual=x, tile_m=tile_m)
    # residual 2: x + FFN(norm(x))
    xn = layer_norm(x, params["ln"][2])
    x = feed_forward(xn.reshape(b * s, d), params["ffn"], x.reshape(b * s, d),
                     tile_m=tile_m, tile_f=tile_f).reshape(b, s, d)
    return x


# -----------------------------------------------------------------------------
# Parameter init (torch.nn.Linear-style), weights stored pre-transposed (in, out)
# -----------------------------------------------------------------------------
def _init_linear(key, d_in, d_out, dtype):
    kw, kb = jax.random.split(key)
    bound = 1.0 / math.sqrt(d_in)
    w = jax.random.uniform(kw, (d_in, d_out), dtype, -bound, bound)
    b = jax.random.uniform(kb, (d_out,), dtype, -bound, bound)
    return w, b


def _init_mha(key, d_model, h, dtype):
    kq, kk, kv, ko = jax.random.split(key, 4)
    wq, bq = _init_linear(kq, d_model, d_model, dtype)
    wk, bk = _init_linear(kk, d_model, d_model, dtype)
    wv, bv = _init_linear(kv, d_model, d_model, dtype)
    wo, bo = _init_linear(ko, d_model, d_model, dtype)
    return dict(h=h, wq=wq, bq=bq, wk=wk, bk=bk, wv=wv, bv=bv, wo=wo, bo=bo)


def init_decoder_params(key, d_model, d_ff, h, dtype=jnp.float32):
    k_self, k_cross, k1, k2, k_ln = jax.random.split(key, 5)
    w1, b1 = _init_linear(k1, d_model, d_ff, dtype)
    w2, b2 = _init_linear(k2, d_ff, d_model, dtype)
    ln = []
    for k in jax.random.split(k_ln, 3):
        ka, kb = jax.random.split(k)
        # torch inits alpha=1, bias=0; randomized here so the scale/shift path is
        # actually exercised by the check (forward semantics are unchanged).
        ln.append(dict(alpha=jax.random.uniform(ka, (1,), dtype, 0.5, 1.5),
                       bias=jax.random.uniform(kb, (1,), dtype, -0.5, 0.5),
                       eps=1e-6))
    return dict(self_attn=_init_mha(k_self, d_model, h, dtype),
                cross_attn=_init_mha(k_cross, d_model, h, dtype),
                ffn=dict(w1=w1, b1=b1, w2=w2, b2=b2),
                ln=ln)


# -----------------------------------------------------------------------------
# Pure-JAX reference (mirrors the PyTorch module literally)
# -----------------------------------------------------------------------------
def _ref_layer_norm(x, ln):
    mean = jnp.mean(x, axis=-1, keepdims=True)
    std = jnp.std(x, axis=0, keepdims=True, ddof=1)       # x.std(dim=1-1), unbiased
    return ln["alpha"] * (x - mean) / (std + ln["eps"]) + ln["bias"]


def _ref_mha(q_in, kv_in, mask, p):
    b, sq, d = q_in.shape
    skv = kv_in.shape[1]
    h = p["h"]
    dk = d // h
    q = (q_in @ p["wq"] + p["bq"]).reshape(b, sq, h, dk).transpose(0, 2, 1, 3)
    k = (kv_in @ p["wk"] + p["bk"]).reshape(b, skv, h, dk).transpose(0, 2, 1, 3)
    v = (kv_in @ p["wv"] + p["bv"]).reshape(b, skv, h, dk).transpose(0, 2, 1, 3)
    s = jnp.einsum("bhqd,bhkd->bhqk", q, k) / math.sqrt(dk)
    s = jnp.where(mask == 0, -1e9, s)
    a = jax.nn.softmax(s, axis=-1)
    ctx = jnp.einsum("bhqk,bhkd->bhqd", a, v).transpose(0, 2, 1, 3).reshape(b, sq, d)
    return ctx @ p["wo"] + p["bo"]


def _ref_ffn(x, p):
    return jnp.maximum(x @ p["w1"] + p["b1"], 0.0) @ p["w2"] + p["b2"]


def ref_decoder_block(x, enc, src_mask, tgt_mask, params):
    xn = _ref_layer_norm(x, params["ln"][0])
    x = x + _ref_mha(xn, xn, tgt_mask, params["self_attn"])
    xn = _ref_layer_norm(x, params["ln"][1])
    x = x + _ref_mha(xn, enc, src_mask, params["cross_attn"])
    xn = _ref_layer_norm(x, params["ln"][2])
    x = x + _ref_ffn(xn, params["ffn"])
    return x


if __name__ == "__main__":
    batch, seq_tgt, seq_src = 4, 8, 16
    d_model, d_ff, h = 32, 64, 4

    key = jax.random.PRNGKey(0)
    kx, ke, kp = jax.random.split(key, 3)
    x = jax.random.normal(kx, (batch, seq_tgt, d_model), dtype=jnp.float32)
    enc = jax.random.normal(ke, (batch, seq_src, d_model), dtype=jnp.float32)
    params = init_decoder_params(kp, d_model, d_ff, h)

    # Causal target mask; all-ones source (no-padding) mask.
    tgt_mask = jnp.tril(jnp.ones((seq_tgt, seq_tgt), jnp.float32)).reshape(1, 1, seq_tgt, seq_tgt)
    src_mask = jnp.ones((batch, 1, 1, seq_src), jnp.float32)

    out = decoder_block(x, enc, src_mask, tgt_mask, params)
    out = jax.block_until_ready(out)
    assert out.shape == x.shape

    ref = ref_decoder_block(x, enc, src_mask, tgt_mask, params)
    max_ref = float(jnp.max(jnp.abs(ref)))
    max_err = float(jnp.max(jnp.abs(out - ref)))
    tol = 3e-3 * max(1.0, max_ref)
    assert max_err <= tol, f"mismatch vs reference: max_err={max_err:.3e} tol={tol:.3e}"

    print("KERNEL_OK")
</pallas_src>

<mosaic_0001>
module attributes {stable_mosaic.version = 11 : i64} {
  func.func @_layernorm_kernel(%arg0: memref<4x8x32xf32, #tpu.memory_space<vmem>>, %arg1: memref<1xf32, #tpu.memory_space<smem>>, %arg2: memref<1xf32, #tpu.memory_space<smem>>, %arg3: memref<4x8x32xf32, #tpu.memory_space<vmem>>) attributes {dimension_semantics = [], scalar_prefetch = 0 : i64, scratch_operands = 0 : i64, tpu.core_type = #tpu.core_type<tc>} {
    %c0 = arith.constant 0 : index
    %c0_0 = arith.constant 0 : index
    %c0_1 = arith.constant 0 : index
    %0 = vector.load %arg0[%c0, %c0_0, %c0_1] : memref<4x8x32xf32, #tpu.memory_space<vmem>>, vector<4x8x32xf32>
    %c0_2 = arith.constant 0 : index
    %1 = memref.load %arg1[%c0_2] : memref<1xf32, #tpu.memory_space<smem>>
    %c0_3 = arith.constant 0 : index
    %2 = memref.load %arg2[%c0_3] : memref<1xf32, #tpu.memory_space<smem>>
    %cst = arith.constant dense<0.000000e+00> : vector<4x8xf32>
    %3 = vector.multi_reduction <add>, %0, %cst [2] : vector<4x8x32xf32> to vector<4x8xf32>
    %4 = vector.shape_cast %3 : vector<4x8xf32> to vector<4x8x1xf32>
    %cst_4 = arith.constant 3.200000e+01 : f32
    %5 = vector.broadcast %cst_4 : f32 to vector<4x8x1xf32>
    %6 = arith.divf %4, %5 : vector<4x8x1xf32>
    %7 = vector.extract_strided_slice %0 {offsets = [0, 0, 0], sizes = [1, 8, 32], strides = [1, 1, 1]} : vector<4x8x32xf32> to vector<1x8x32xf32>
    %8 = vector.shape_cast %7 : vector<1x8x32xf32> to vector<8x32xf32>
    %9 = vector.extract_strided_slice %0 {offsets = [1, 0, 0], sizes = [1, 8, 32], strides = [1, 1, 1]} : vector<4x8x32xf32> to vector<1x8x32xf32>
    %10 = vector.shape_cast %9 : vector<1x8x32xf32> to vector<8x32xf32>
    %11 = vector.extract_strided_slice %0 {offsets = [2, 0, 0], sizes = [1, 8, 32], strides = [1, 1, 1]} : vector<4x8x32xf32> to vector<1x8x32xf32>
    %12 = vector.shape_cast %11 : vector<1x8x32xf32> to vector<8x32xf32>
    %13 = vector.extract_strided_slice %0 {offsets = [3, 0, 0], sizes = [1, 8, 32], strides = [1, 1, 1]} : vector<4x8x32xf32> to vector<1x8x32xf32>
    %14 = vector.shape_cast %13 : vector<1x8x32xf32> to vector<8x32xf32>
    %cst_5 = arith.constant 0.000000e+00 : f32
    %15 = vector.broadcast %cst_5 : f32 to vector<8x32xf32>
    %16 = arith.addf %15, %8 : vector<8x32xf32>
    %17 = arith.addf %16, %10 : vector<8x32xf32>
    %18 = arith.addf %17, %12 : vector<8x32xf32>
    %19 = arith.addf %18, %14 : vector<8x32xf32>
    %cst_6 = arith.constant 4.000000e+00 : f32
    %20 = vector.broadcast %cst_6 : f32 to vector<8x32xf32>
    %21 = arith.divf %19, %20 : vector<8x32xf32>
    %22 = arith.subf %8, %21 : vector<8x32xf32>
    %23 = arith.mulf %22, %22 : vector<8x32xf32>
    %cst_7 = arith.constant 0.000000e+00 : f32
    %24 = vector.broadcast %cst_7 : f32 to vector<8x32xf32>
    %25 = arith.addf %24, %23 : vector<8x32xf32>
    %26 = arith.subf %10, %21 : vector<8x32xf32>
    %27 = arith.mulf %26, %26 : vector<8x32xf32>
    %28 = arith.addf %25, %27 : vector<8x32xf32>
    %29 = arith.subf %12, %21 : vector<8x32xf32>
    %30 = arith.mulf %29, %29 : vector<8x32xf32>
    %31 = arith.addf %28, %30 : vector<8x32xf32>
    %32 = arith.subf %14, %21 : vector<8x32xf32>
    %33 = arith.mulf %32, %32 : vector<8x32xf32>
    %34 = arith.addf %31, %33 : vector<8x32xf32>
    %cst_8 = arith.constant 3.000000e+00 : f32
    %35 = vector.broadcast %cst_8 : f32 to vector<8x32xf32>
    %36 = arith.divf %34, %35 : vector<8x32xf32>
    %37 = math.sqrt %36 : vector<8x32xf32>
    %38 = vector.broadcast %6 : vector<4x8x1xf32> to vector<4x8x32xf32>
    %39 = arith.subf %0, %38 : vector<4x8x32xf32>
    %40 = vector.broadcast %1 : f32 to vector<4x8x32xf32>
    %41 = arith.mulf %40, %39 : vector<4x8x32xf32>
    %cst_9 = arith.constant 9.99999997E-7 : f32
    %42 = vector.broadcast %cst_9 : f32 to vector<8x32xf32>
    %43 = arith.addf %37, %42 : vector<8x32xf32>
    %44 = vector.shape_cast %43 : vector<8x32xf32> to vector<1x8x32xf32>
    %45 = vector.broadcast %44 : vector<1x8x32xf32> to vector<4x8x32xf32>
    %46 = arith.divf %41, %45 : vector<4x8x32xf32>
    %47 = vector.broadcast %2 : f32 to vector<4x8x32xf32>
    %48 = arith.addf %46, %47 : vector<4x8x32xf32>
    %c0_10 = arith.constant 0 : index
    %c0_11 = arith.constant 0 : index
    %c0_12 = arith.constant 0 : index
    %49 = vector.load %arg3[%c0_10, %c0_11, %c0_12] : memref<4x8x32xf32, #tpu.memory_space<vmem>>, vector<4x8x32xf32>
    tpu.vector_store %arg3[%c0_10, %c0_11, %c0_12], %48 {strides = array<i32>} : memref<4x8x32xf32, #tpu.memory_space<vmem>>, vector<4x8x32xf32>,
    return
  }
}

</mosaic_0001>

<llo_original>
// kernel: tpu_custom_call.1
$region0: #{tpu_custom_call.1}
  #allocation0 [shape = 'u32[]', space=smem, size = 0x4, offset = 0x4, fixed_abs, tag = 'smem constant byte address 0x4 - core index']
  #allocation1 [shape = 'u32[144,128]{1,0:T(1,128)}', space=vmem, size = 0x12000, scoped, tag = 'internal scratch']
  #allocation2 [shape = 'f32[1]{0:T(128)S(6)}', space=smem, size = 0x200, scoped, tag = 'scoped memory for tpu_custom_call.1']
  #allocation3 [shape = 'f32[1]{0:T(128)S(6)}', space=smem, size = 0x200, scoped, tag = 'scoped memory for tpu_custom_call.1']
  %s0 = inlined_call_operand.hbm [shape: f32[4,8,32], index: 0, kind: input, shape index: {}]
  %s1 = inlined_call_operand.<no memory space> [shape: f32[1], index: 1, kind: input, shape index: {}]
  %s2 = inlined_call_operand.<no memory space> [shape: f32[1], index: 2, kind: input, shape index: {}]
  %s3 = inlined_call_operand.hbm [shape: f32[4,8,32], index: 3, kind: output, shape index: {}]
  %s4 = sld [smem:[#allocation0]]
  $region26: #{tpu_custom_call.1} parent=0
    _
  %s6 = ssub.s32 1, %s4
  %s7 = scalar_select 0, %s6, %s4
  %8 = sst [smem:[#allocation2]] %s1
  %9 = sst [smem:[#allocation3]] %s2
  $region1: #{tpu_custom_call.1} parent=0
    #allocation4 [shape = 'u8[16384]{0}', space=vmem, size = 0x4000, scoped, tag = 'input window, operand 0, single buffered']
    #allocation5 [shape = 's32[1]{0}', space=sflag, size = 0x4, scoped, tag = 'scoped memory for tpu_custom_call.1']
    #allocation6 [shape = 's32[1]{0}', space=sflag, size = 0x4, scoped, tag = 'scoped memory for tpu_custom_call.1']
    #allocation7 [shape = 'u8[16384]{0}', space=vmem, size = 0x4000, scoped, tag = 'output window, operand 0, single buffered']
    %10 = vsyncpa [#allocation5], 0
    %11 = vsyncpa [#allocation6], 0
    // Predicated region
    $region2: #{tpu_custom_call.1} parent=1 // pred_check
      _
    $region3: #{tpu_custom_call.1} parent=1 // pred_check_branch
      %13 = sbr.rel (0) target = $region5
    $region4: #{tpu_custom_call.1} parent=1 // pred_region
      %s15 = ssub.s32 512, 512
      %16 = vsyncadd [#allocation5], %s15
      %s17 = sshll.u32 [#allocation4], 4
      %s18 = int_to_ptr.vmem [resolvable:$true] %s17
      %23 = dma.hbm_to_vmem [thread:$0]  %s0, 512, %s18, [#allocation5], 128, 128, 8
    $region5: #{tpu_custom_call.1} parent=1 // pred_fallthru
      _
    // Predicated region
    $region6: #{tpu_custom_call.1} parent=1 // pred_check
      _
    $region7: #{tpu_custom_call.1} parent=1 // pred_check_branch
      %25 = sbr.rel (0) target = $region9
    $region8: #{tpu_custom_call.1} parent=1 // pred_region
      _
    $region9: #{tpu_custom_call.1} parent=1 // pred_fallthru
      _
    // Predicated region
    $region10: #{tpu_custom_call.1} parent=1 // pred_check
      _
    $region11: #{tpu_custom_call.1} parent=1 // pred_check_branch
      %27 = sbr.rel (0) target = $region13
    $region12: #{tpu_custom_call.1} parent=1 // pred_region
      _
    $region13: #{tpu_custom_call.1} parent=1 // pred_fallthru
      _
    // Predicated region
    $region14: #{tpu_custom_call.1} parent=1 // pred_check
      _
    $region15: #{tpu_custom_call.1} parent=1 // pred_check_branch
      %29 = sbr.rel (0) target = $region17
    $region16: #{tpu_custom_call.1} parent=1 // pred_region
      %30 = dma.done [#allocation5], 512
    $region17: #{tpu_custom_call.1} parent=1 // pred_fallthru
      _
    %v31 = vld [vmem:[#allocation4] sm:$0xff]
    %v32 = vld [vmem:[#allocation4 + $0x8] sm:$0xff]
    %v33 = vld [vmem:[#allocation4 + $0x10] sm:$0xff]
    %v34 = vld [vmem:[#allocation4 + $0x18] sm:$0xff]
    %s35 = sld [smem:[#allocation2]]
    %s36 = sld [smem:[#allocation3]]
    %vm37 = vcmask 261120
    %v38 = vsel %vm37, %v31, 0.0
    %39 = vadd.xlane.f32.xlu0 %v38
    %v40 = vpop.xlane.xlu0 %39
    %v41 = vsel %vm37, %v32, 0.0
    %42 = vadd.xlane.f32.xlu0 %v41
    %v43 = vpop.xlane.xlu0 %42
    %v44 = vsel %vm37, %v33, 0.0
    %45 = vadd.xlane.f32.xlu0 %v44
    %v46 = vpop.xlane.xlu0 %45
    %v47 = vsel %vm37, %v34, 0.0
    %48 = vadd.xlane.f32.xlu0 %v47
    %v49 = vpop.xlane.xlu0 %48
    %v50 = vrcp.pop 32.0
    %v51 = vmul.f32 %v40, %v50
    %v52 = vmul.f32 %v43, %v50
    %v53 = vmul.f32 %v46, %v50
    %v54 = vmul.f32 %v49, %v50
    %v55 = vadd.f32 %v31, 0.0
    %v56 = vadd.f32 %v55, %v32
    %v57 = vadd.f32 %v56, %v33
    %v58 = vadd.f32 %v57, %v34
    %v59 = vrcp.pop 4.0
    %v60 = vmul.f32 %v58, %v59
    %v61 = vsub.f32 %v31, %v60
    %v62 = vmul.f32 %v61, %v61
    %v63 = vadd.f32 %v62, 0.0
    %v64 = vsub.f32 %v32, %v60
    %v65 = vmul.f32 %v64, %v64
    %v66 = vadd.f32 %v63, %v65
    %v67 = vsub.f32 %v33, %v60
    %v68 = vmul.f32 %v67, %v67
    %v69 = vadd.f32 %v66, %v68
    %v70 = vsub.f32 %v34, %v60
    %v71 = vmul.f32 %v70, %v70
    %v72 = vadd.f32 %v69, %v71
    %v73 = vrcp.pop 3.0
    %v74 = vmul.f32 %v72, %v73
    %v75 = vrsqrt.pop %v74
    %v76 = vmul.f32 %v74, %v75
    %vm77 = vcmp.eq.f32.partialorder %v74, inf
    %v78 = vsel %vm77, %v74, %v76
    %vm79 = vcmp.eq.f32.partialorder %v74, 0.0
    %v80 = vand.u32 %v74, 2147483648
    %v81 = vsel %vm79, %v80, %v78
    %v82 = vsub.f32 %v31, %v51
    %v83 = vsub.f32 %v32, %v52
    %v84 = vsub.f32 %v33, %v53
    %v85 = vsub.f32 %v34, %v54
    %v86 = vstv %s35
    %v87 = vmul.f32 %v86, %v82
    %v88 = vmul.f32 %v86, %v83
    %v89 = vmul.f32 %v86, %v84
    %v90 = vmul.f32 %v86, %v85
    %v91 = vadd.f32 %v81, 1e-06
    %v92 = vrcp.pop %v91
    %v93 = vmul.f32 %v87, %v92
    %v94 = vmul.f32 %v88, %v92
    %v95 = vmul.f32 %v89, %v92
    %v96 = vmul.f32 %v90, %v92
    %v97 = vstv %s36
    %v98 = vadd.f32 %v93, %v97
    %v99 = vadd.f32 %v94, %v97
    %v100 = vadd.f32 %v95, %v97
    %v101 = vadd.f32 %v96, %v97
    %102 = vst.msk [vmem:[#allocation7] sm:$0xff] %vm37, %v98
    %103 = vst.msk [vmem:[#allocation7 + $0x8] sm:$0xff] %vm37, %v99
    %104 = vst.msk [vmem:[#allocation7 + $0x10] sm:$0xff] %vm37, %v100
    %105 = vst.msk [vmem:[#allocation7 + $0x18] sm:$0xff] %vm37, %v101
    // Predicated region
    $region18: #{tpu_custom_call.1} parent=1 // pred_check
      _
    $region19: #{tpu_custom_call.1} parent=1 // pred_check_branch
      %107 = sbr.rel (0) target = $region21
    $region20: #{tpu_custom_call.1} parent=1 // pred_region
      %s109 = ssub.s32 512, 512
      %110 = vsyncadd [#allocation6], %s109
      %s111 = sshll.u32 [#allocation7], 4
      %s112 = int_to_ptr.vmem [resolvable:$true] %s111
      %117 = dma.vmem_to_hbm [thread:$0]  %s112, 512, %s3, [#allocation6], 128, 128, 8
    $region21: #{tpu_custom_call.1} parent=1 // pred_fallthru
      _
    // Predicated region
    $region22: #{tpu_custom_call.1} parent=1 // pred_check
      _
    $region23: #{tpu_custom_call.1} parent=1 // pred_check_branch
      %119 = sbr.rel (0) target = $region25
    $region24: #{tpu_custom_call.1} parent=1 // pred_region
      %120 = dma.done [#allocation6], 512
    $region25: #{tpu_custom_call.1} parent=1 // pred_fallthru
      _
    %121 = vsyncpa [#allocation5], 1
    %122 = vsyncpa [#allocation6], 1

</llo_original>
